<compile_context>
chip_gen: v5e
topology: v5e:2x2
jax: 0.10.0
libtpu: 0.0.40
codegen_flags: <defaults>
</compile_context>

<pallas_src>
import functools

import jax
import jax.numpy as jnp
from jax.experimental import pallas as pl
from jax.experimental.pallas import tpu as pltpu


def _leaky_relu(x, slope=0.2):
    return jnp.where(x > 0, x, slope * x)


def _gcn_kernel(nodes_ref, adj_ref, w_ref, b_ref, o_ref, *, mxu_dtype):
    """One grid step processes `bt` fused batches.

    nodes_ref: (bt, C_in, N)     adj_ref: (bt, N, N)
    w_ref:     (C_out, C_in)     already in mxu_dtype, grid-resident
    b_ref:     (C_out, 1)        f32, grid-resident
    o_ref:     (1, C_out, bt*N)  lane-dense output slab
    """
    bt = nodes_ref.shape[0]

    # Step 1: per-batch nodes @ adj on the MXU (mxu_dtype in, f32 acc).
    # LeakyReLU + down-cast are fused per part and the bt parts are assembled
    # in registers along the lane axis: no scratch, no masked sub-lane stores.
    parts = []
    for j in range(bt):
        x = nodes_ref[j].astype(mxu_dtype)                     # (C_in, N)
        a = adj_ref[j].astype(mxu_dtype)                       # (N, N)
        h = jnp.dot(x, a, preferred_element_type=jnp.float32)  # (C_in, N) f32
        parts.append(_leaky_relu(h).astype(mxu_dtype))
    h_slab = parts[0] if bt == 1 else jnp.concatenate(parts, axis=-1)  # (C_in, bt*N)

    # Step 2: 1x1 Conv1d == one lane-dense matmul over all fused batches.
    y = jnp.dot(w_ref[...], h_slab,
                preferred_element_type=jnp.float32)            # (C_out, bt*N) f32
    y = _leaky_relu(y + b_ref[...])                            # bias + act in f32
    o_ref[0] = y.astype(o_ref.dtype)


def _vmem_capacity_bytes():
    """Physical VMEM of the current TPU generation (fallback: v7x-safe 64 MiB)."""
    try:
        return int(pltpu.get_tpu_info().vmem_capacity_bytes)
    except Exception:
        return 64 * 1024 * 1024


def _block_bytes(bt, C_in, C_out, N, in_bytes, out_bytes):
    lanes = bt * N
    return (
        2 * bt * C_in * N * in_bytes        # nodes block, double-buffered
        + 2 * bt * N * N * in_bytes         # adj block, double-buffered
        + 2 * C_out * lanes * out_bytes     # output block, double-buffered
        + C_in * lanes * 2                  # bf16 h slab (register/spill headroom)
        + (C_in + C_out) * lanes * 4        # f32 matmul results headroom
        + C_out * C_in * 2 + C_out * 4      # resident weight (bf16) + bias
    )


def _choose_block_b(B, C_in, C_out, N, in_bytes=4, out_bytes=4):
    """How many batches to fuse per grid step (generation-aware VMEM budget)."""
    budget = int(0.45 * _vmem_capacity_bytes())
    fits = [bt for bt in range(1, B + 1)
            if B % bt == 0
            and _block_bytes(bt, C_in, C_out, N, in_bytes, out_bytes) <= budget]
    if not fits:
        return 1

    def score(bt):
        lanes = bt * N
        grid_b = B // bt
        return (
            lanes % 128 == 0,                  # lane-dense matmul / unmasked stores
            grid_b >= 2 and grid_b % 2 == 0,   # keep both v7x TensorCores busy
            min(lanes, 1024),                  # amortize ~0.35 us/step overhead
            -bt,                               # tie-break: fewer live partials
        )

    return max(fits, key=score)


def graph_convolution(adj, nodes, weight, bias, *, block_b=None,
                      mxu_dtype=jnp.bfloat16):
    """adj: (B, N, N), nodes: (B, C_in, N), weight: (C_out, C_in), bias: (C_out,)."""
    B, C_in, N = nodes.shape
    C_out = weight.shape[0]
    if block_b is None:
        block_b = _choose_block_b(B, C_in, C_out, N)
    assert B % block_b == 0, (B, block_b)
    grid_b = B // block_b
    lanes = block_b * N

    vmem_cap = _vmem_capacity_bytes()
    vmem_limit = max(32 * 1024 * 1024, int(0.6 * vmem_cap))

    w_cast = weight.astype(mxu_dtype)                 # tiny resident param: cast once
    bias2d = bias.reshape(C_out, 1).astype(jnp.float32)

    kernel = functools.partial(_gcn_kernel, mxu_dtype=mxu_dtype)

    out_flat = pl.pallas_call(
        kernel,
        out_shape=jax.ShapeDtypeStruct((grid_b, C_out, lanes), nodes.dtype),
        grid=(grid_b,),
        in_specs=[
            pl.BlockSpec((block_b, C_in, N), lambda g: (g, 0, 0)),
            pl.BlockSpec((block_b, N, N), lambda g: (g, 0, 0)),
            pl.BlockSpec((C_out, C_in), lambda g: (0, 0)),   # resident across grid
            pl.BlockSpec((C_out, 1), lambda g: (0, 0)),      # resident across grid
        ],
        out_specs=pl.BlockSpec((1, C_out, lanes), lambda g: (g, 0, 0)),
        compiler_params=pltpu.CompilerParams(
            dimension_semantics=("parallel",),
            vmem_limit_bytes=vmem_limit,
        ),
    )(nodes, adj, w_cast, bias2d)

    # Undo the (batch, node) lane flattening outside the kernel:
    # (grid_b, C_out, block_b*N) -> (B, C_out, N).  Kept in the wrapper so the
    # kernel's HBM store stays a single unmasked lane-dense pass (N << 128).
    out = out_flat.reshape(grid_b, C_out, block_b, N)
    out = out.transpose(0, 2, 1, 3).reshape(B, C_out, N)
    return out


def _reference(adj, nodes, weight, bias):
    h = jnp.einsum("bcn,bnm->bcm", nodes, adj)
    h = jnp.where(h > 0, h, 0.2 * h)
    y = jnp.einsum("oc,bcn->bon", weight, h) + bias[None, :, None]
    return jnp.where(y > 0, y, 0.2 * y)


if __name__ == "__main__":
    # Small but representative: 16 graphs of 16 nodes, 32 -> 32 channels.
    B, C_in, C_out, N = 16, 32, 32, 16

    key = jax.random.PRNGKey(0)
    k1, k2, k3, k4 = jax.random.split(key, 4)

    nodes = jax.random.normal(k1, (B, C_in, N), dtype=jnp.float32)
    adj = jax.random.normal(k2, (B, N, N), dtype=jnp.float32)
    # Conv1d(in_dim, out_dim, 1) parameters (kernel-size dim squeezed).
    weight = jax.random.normal(k3, (C_out, C_in), dtype=jnp.float32) * 0.1
    bias = jax.random.normal(k4, (C_out,), dtype=jnp.float32) * 0.1

    ref = _reference(adj, nodes, weight, bias)

    # Default fast path: bf16 MXU inputs, f32 accumulation.
    out = jax.block_until_ready(graph_convolution(adj, nodes, weight, bias))
    assert out.shape == (B, C_out, N)
    max_err = float(jnp.max(jnp.abs(out - ref)))
    assert jnp.allclose(out, ref, atol=1e-1, rtol=5e-2), max_err

    # Exact-input fallback path (addresses the bf16-drift concern): same
    # kernel with f32 MXU operands, checked at a tighter tolerance.
    out_f32 = jax.block_until_ready(
        graph_convolution(adj, nodes, weight, bias, mxu_dtype=jnp.float32))
    max_err_f32 = float(jnp.max(jnp.abs(out_f32 - ref)))
    assert jnp.allclose(out_f32, ref, atol=5e-2, rtol=2e-2), max_err_f32

    print("KERNEL_OK")
</pallas_src>

<mosaic_0001>
module attributes {stable_mosaic.version = 11 : i64} {
  func.func @_gcn_kernel(%arg0: i32, %arg1: memref<8x32x16xf32, #tpu.memory_space<vmem>>, %arg2: memref<8x16x16xf32, #tpu.memory_space<vmem>>, %arg3: memref<32x32xbf16, #tpu.memory_space<vmem>>, %arg4: memref<32x1xf32, #tpu.memory_space<vmem>>, %arg5: memref<1x32x128xf32, #tpu.memory_space<vmem>>) attributes {dimension_semantics = [#tpu.dimension_semantics<parallel>], iteration_bounds = array<i64: 2>, scalar_prefetch = 0 : i64, scratch_operands = 0 : i64, tpu.core_type = #tpu.core_type<tc>, window_params = [{transform_indices = @transform_0, window_bounds = array<i64: 8, 32, 16>}, {transform_indices = @transform_1, window_bounds = array<i64: 8, 16, 16>}, {pipeline_mode = #tpu.pipeline_mode<synchronous>, transform_indices = @transform_2, window_bounds = array<i64: 32, 32>}, {pipeline_mode = #tpu.pipeline_mode<synchronous>, transform_indices = @transform_3, window_bounds = array<i64: 32, 1>}, {transform_indices = @transform_4, window_bounds = array<i64: 1, 32, 128>}]} {
    %c0 = arith.constant 0 : index
    %c0_0 = arith.constant 0 : index
    %c0_1 = arith.constant 0 : index
    %0 = vector.load %arg1[%c0, %c0_0, %c0_1] : memref<8x32x16xf32, #tpu.memory_space<vmem>>, vector<1x32x16xf32>
    %1 = vector.shape_cast %0 : vector<1x32x16xf32> to vector<32x16xf32>
    %2 = arith.truncf %1 : vector<32x16xf32> to vector<32x16xbf16>
    %c0_2 = arith.constant 0 : index
    %c0_3 = arith.constant 0 : index
    %c0_4 = arith.constant 0 : index
    %3 = vector.load %arg2[%c0_2, %c0_3, %c0_4] : memref<8x16x16xf32, #tpu.memory_space<vmem>>, vector<1x16x16xf32>
    %4 = vector.shape_cast %3 : vector<1x16x16xf32> to vector<16x16xf32>
    %5 = arith.truncf %4 : vector<16x16xf32> to vector<16x16xbf16>
    %cst = arith.constant dense<0.000000e+00> : vector<32x16xf32>
    %6 = tpu.matmul %2, %5, %cst {dimension_numbers = #tpu.dot_dimension_numbers<[1], [0], [0], [1], [0, 0, 1, 1], [], []>} : vector<32x16xbf16>, vector<16x16xbf16>, vector<32x16xf32> -> vector<32x16xf32>
    %cst_5 = arith.constant 0.000000e+00 : f32
    %7 = vector.broadcast %cst_5 : f32 to vector<32x16xf32>
    %8 = arith.cmpf ogt, %6, %7 : vector<32x16xf32>
    %cst_6 = arith.constant 2.000000e-01 : f32
    %9 = vector.broadcast %cst_6 : f32 to vector<32x16xf32>
    %10 = arith.mulf %9, %6 : vector<32x16xf32>
    %11 = arith.select %8, %6, %10 : vector<32x16xi1>, vector<32x16xf32>
    %12 = arith.truncf %11 : vector<32x16xf32> to vector<32x16xbf16>
    %c1 = arith.constant 1 : index
    %c0_7 = arith.constant 0 : index
    %c0_8 = arith.constant 0 : index
    %13 = vector.load %arg1[%c1, %c0_7, %c0_8] : memref<8x32x16xf32, #tpu.memory_space<vmem>>, vector<1x32x16xf32>
    %14 = vector.shape_cast %13 : vector<1x32x16xf32> to vector<32x16xf32>
    %15 = arith.truncf %14 : vector<32x16xf32> to vector<32x16xbf16>
    %c1_9 = arith.constant 1 : index
    %c0_10 = arith.constant 0 : index
    %c0_11 = arith.constant 0 : index
    %16 = vector.load %arg2[%c1_9, %c0_10, %c0_11] : memref<8x16x16xf32, #tpu.memory_space<vmem>>, vector<1x16x16xf32>
    %17 = vector.shape_cast %16 : vector<1x16x16xf32> to vector<16x16xf32>
    %18 = arith.truncf %17 : vector<16x16xf32> to vector<16x16xbf16>
    %cst_12 = arith.constant dense<0.000000e+00> : vector<32x16xf32>
    %19 = tpu.matmul %15, %18, %cst_12 {dimension_numbers = #tpu.dot_dimension_numbers<[1], [0], [0], [1], [0, 0, 1, 1], [], []>} : vector<32x16xbf16>, vector<16x16xbf16>, vector<32x16xf32> -> vector<32x16xf32>
    %cst_13 = arith.constant 0.000000e+00 : f32
    %20 = vector.broadcast %cst_13 : f32 to vector<32x16xf32>
    %21 = arith.cmpf ogt, %19, %20 : vector<32x16xf32>
    %cst_14 = arith.constant 2.000000e-01 : f32
    %22 = vector.broadcast %cst_14 : f32 to vector<32x16xf32>
    %23 = arith.mulf %22, %19 : vector<32x16xf32>
    %24 = arith.select %21, %19, %23 : vector<32x16xi1>, vector<32x16xf32>
    %25 = arith.truncf %24 : vector<32x16xf32> to vector<32x16xbf16>
    %c2 = arith.constant 2 : index
    %c0_15 = arith.constant 0 : index
    %c0_16 = arith.constant 0 : index
    %26 = vector.load %arg1[%c2, %c0_15, %c0_16] : memref<8x32x16xf32, #tpu.memory_space<vmem>>, vector<1x32x16xf32>
    %27 = vector.shape_cast %26 : vector<1x32x16xf32> to vector<32x16xf32>
    %28 = arith.truncf %27 : vector<32x16xf32> to vector<32x16xbf16>
    %c2_17 = arith.constant 2 : index
    %c0_18 = arith.constant 0 : index
    %c0_19 = arith.constant 0 : index
    %29 = vector.load %arg2[%c2_17, %c0_18, %c0_19] : memref<8x16x16xf32, #tpu.memory_space<vmem>>, vector<1x16x16xf32>
    %30 = vector.shape_cast %29 : vector<1x16x16xf32> to vector<16x16xf32>
    %31 = arith.truncf %30 : vector<16x16xf32> to vector<16x16xbf16>
    %cst_20 = arith.constant dense<0.000000e+00> : vector<32x16xf32>
    %32 = tpu.matmul %28, %31, %cst_20 {dimension_numbers = #tpu.dot_dimension_numbers<[1], [0], [0], [1], [0, 0, 1, 1], [], []>} : vector<32x16xbf16>, vector<16x16xbf16>, vector<32x16xf32> -> vector<32x16xf32>
    %cst_21 = arith.constant 0.000000e+00 : f32
    %33 = vector.broadcast %cst_21 : f32 to vector<32x16xf32>
    %34 = arith.cmpf ogt, %32, %33 : vector<32x16xf32>
    %cst_22 = arith.constant 2.000000e-01 : f32
    %35 = vector.broadcast %cst_22 : f32 to vector<32x16xf32>
    %36 = arith.mulf %35, %32 : vector<32x16xf32>
    %37 = arith.select %34, %32, %36 : vector<32x16xi1>, vector<32x16xf32>
    %38 = arith.truncf %37 : vector<32x16xf32> to vector<32x16xbf16>
    %c3 = arith.constant 3 : index
    %c0_23 = arith.constant 0 : index
    %c0_24 = arith.constant 0 : index
    %39 = vector.load %arg1[%c3, %c0_23, %c0_24] : memref<8x32x16xf32, #tpu.memory_space<vmem>>, vector<1x32x16xf32>
    %40 = vector.shape_cast %39 : vector<1x32x16xf32> to vector<32x16xf32>
    %41 = arith.truncf %40 : vector<32x16xf32> to vector<32x16xbf16>
    %c3_25 = arith.constant 3 : index
    %c0_26 = arith.constant 0 : index
    %c0_27 = arith.constant 0 : index
    %42 = vector.load %arg2[%c3_25, %c0_26, %c0_27] : memref<8x16x16xf32, #tpu.memory_space<vmem>>, vector<1x16x16xf32>
    %43 = vector.shape_cast %42 : vector<1x16x16xf32> to vector<16x16xf32>
    %44 = arith.truncf %43 : vector<16x16xf32> to vector<16x16xbf16>
    %cst_28 = arith.constant dense<0.000000e+00> : vector<32x16xf32>
    %45 = tpu.matmul %41, %44, %cst_28 {dimension_numbers = #tpu.dot_dimension_numbers<[1], [0], [0], [1], [0, 0, 1, 1], [], []>} : vector<32x16xbf16>, vector<16x16xbf16>, vector<32x16xf32> -> vector<32x16xf32>
    %cst_29 = arith.constant 0.000000e+00 : f32
    %46 = vector.broadcast %cst_29 : f32 to vector<32x16xf32>
    %47 = arith.cmpf ogt, %45, %46 : vector<32x16xf32>
    %cst_30 = arith.constant 2.000000e-01 : f32
    %48 = vector.broadcast %cst_30 : f32 to vector<32x16xf32>
    %49 = arith.mulf %48, %45 : vector<32x16xf32>
    %50 = arith.select %47, %45, %49 : vector<32x16xi1>, vector<32x16xf32>
    %51 = arith.truncf %50 : vector<32x16xf32> to vector<32x16xbf16>
    %c4 = arith.constant 4 : index
    %c0_31 = arith.constant 0 : index
    %c0_32 = arith.constant 0 : index
    %52 = vector.load %arg1[%c4, %c0_31, %c0_32] : memref<8x32x16xf32, #tpu.memory_space<vmem>>, vector<1x32x16xf32>
    %53 = vector.shape_cast %52 : vector<1x32x16xf32> to vector<32x16xf32>
    %54 = arith.truncf %53 : vector<32x16xf32> to vector<32x16xbf16>
    %c4_33 = arith.constant 4 : index
    %c0_34 = arith.constant 0 : index
    %c0_35 = arith.constant 0 : index
    %55 = vector.load %arg2[%c4_33, %c0_34, %c0_35] : memref<8x16x16xf32, #tpu.memory_space<vmem>>, vector<1x16x16xf32>
    %56 = vector.shape_cast %55 : vector<1x16x16xf32> to vector<16x16xf32>
    %57 = arith.truncf %56 : vector<16x16xf32> to vector<16x16xbf16>
    %cst_36 = arith.constant dense<0.000000e+00> : vector<32x16xf32>
    %58 = tpu.matmul %54, %57, %cst_36 {dimension_numbers = #tpu.dot_dimension_numbers<[1], [0], [0], [1], [0, 0, 1, 1], [], []>} : vector<32x16xbf16>, vector<16x16xbf16>, vector<32x16xf32> -> vector<32x16xf32>
    %cst_37 = arith.constant 0.000000e+00 : f32
    %59 = vector.broadcast %cst_37 : f32 to vector<32x16xf32>
    %60 = arith.cmpf ogt, %58, %59 : vector<32x16xf32>
    %cst_38 = arith.constant 2.000000e-01 : f32
    %61 = vector.broadcast %cst_38 : f32 to vector<32x16xf32>
    %62 = arith.mulf %61, %58 : vector<32x16xf32>
    %63 = arith.select %60, %58, %62 : vector<32x16xi1>, vector<32x16xf32>
    %64 = arith.truncf %63 : vector<32x16xf32> to vector<32x16xbf16>
    %c5 = arith.constant 5 : index
    %c0_39 = arith.constant 0 : index
    %c0_40 = arith.constant 0 : index
    %65 = vector.load %arg1[%c5, %c0_39, %c0_40] : memref<8x32x16xf32, #tpu.memory_space<vmem>>, vector<1x32x16xf32>
    %66 = vector.shape_cast %65 : vector<1x32x16xf32> to vector<32x16xf32>
    %67 = arith.truncf %66 : vector<32x16xf32> to vector<32x16xbf16>
    %c5_41 = arith.constant 5 : index
    %c0_42 = arith.constant 0 : index
    %c0_43 = arith.constant 0 : index
    %68 = vector.load %arg2[%c5_41, %c0_42, %c0_43] : memref<8x16x16xf32, #tpu.memory_space<vmem>>, vector<1x16x16xf32>
    %69 = vector.shape_cast %68 : vector<1x16x16xf32> to vector<16x16xf32>
    %70 = arith.truncf %69 : vector<16x16xf32> to vector<16x16xbf16>
    %cst_44 = arith.constant dense<0.000000e+00> : vector<32x16xf32>
    %71 = tpu.matmul %67, %70, %cst_44 {dimension_numbers = #tpu.dot_dimension_numbers<[1], [0], [0], [1], [0, 0, 1, 1], [], []>} : vector<32x16xbf16>, vector<16x16xbf16>, vector<32x16xf32> -> vector<32x16xf32>
    %cst_45 = arith.constant 0.000000e+00 : f32
    %72 = vector.broadcast %cst_45 : f32 to vector<32x16xf32>
    %73 = arith.cmpf ogt, %71, %72 : vector<32x16xf32>
    %cst_46 = arith.constant 2.000000e-01 : f32
    %74 = vector.broadcast %cst_46 : f32 to vector<32x16xf32>
    %75 = arith.mulf %74, %71 : vector<32x16xf32>
    %76 = arith.select %73, %71, %75 : vector<32x16xi1>, vector<32x16xf32>
    %77 = arith.truncf %76 : vector<32x16xf32> to vector<32x16xbf16>
    %c6 = arith.constant 6 : index
    %c0_47 = arith.constant 0 : index
    %c0_48 = arith.constant 0 : index
    %78 = vector.load %arg1[%c6, %c0_47, %c0_48] : memref<8x32x16xf32, #tpu.memory_space<vmem>>, vector<1x32x16xf32>
    %79 = vector.shape_cast %78 : vector<1x32x16xf32> to vector<32x16xf32>
    %80 = arith.truncf %79 : vector<32x16xf32> to vector<32x16xbf16>
    %c6_49 = arith.constant 6 : index
    %c0_50 = arith.constant 0 : index
    %c0_51 = arith.constant 0 : index
    %81 = vector.load %arg2[%c6_49, %c0_50, %c0_51] : memref<8x16x16xf32, #tpu.memory_space<vmem>>, vector<1x16x16xf32>
    %82 = vector.shape_cast %81 : vector<1x16x16xf32> to vector<16x16xf32>
    %83 = arith.truncf %82 : vector<16x16xf32> to vector<16x16xbf16>
    %cst_52 = arith.constant dense<0.000000e+00> : vector<32x16xf32>
    %84 = tpu.matmul %80, %83, %cst_52 {dimension_numbers = #tpu.dot_dimension_numbers<[1], [0], [0], [1], [0, 0, 1, 1], [], []>} : vector<32x16xbf16>, vector<16x16xbf16>, vector<32x16xf32> -> vector<32x16xf32>
    %cst_53 = arith.constant 0.000000e+00 : f32
    %85 = vector.broadcast %cst_53 : f32 to vector<32x16xf32>
    %86 = arith.cmpf ogt, %84, %85 : vector<32x16xf32>
    %cst_54 = arith.constant 2.000000e-01 : f32
    %87 = vector.broadcast %cst_54 : f32 to vector<32x16xf32>
    %88 = arith.mulf %87, %84 : vector<32x16xf32>
    %89 = arith.select %86, %84, %88 : vector<32x16xi1>, vector<32x16xf32>
    %90 = arith.truncf %89 : vector<32x16xf32> to vector<32x16xbf16>
    %c7 = arith.constant 7 : index
    %c0_55 = arith.constant 0 : index
    %c0_56 = arith.constant 0 : index
    %91 = vector.load %arg1[%c7, %c0_55, %c0_56] : memref<8x32x16xf32, #tpu.memory_space<vmem>>, vector<1x32x16xf32>
    %92 = vector.shape_cast %91 : vector<1x32x16xf32> to vector<32x16xf32>
    %93 = arith.truncf %92 : vector<32x16xf32> to vector<32x16xbf16>
    %c7_57 = arith.constant 7 : index
    %c0_58 = arith.constant 0 : index
    %c0_59 = arith.constant 0 : index
    %94 = vector.load %arg2[%c7_57, %c0_58, %c0_59] : memref<8x16x16xf32, #tpu.memory_space<vmem>>, vector<1x16x16xf32>
    %95 = vector.shape_cast %94 : vector<1x16x16xf32> to vector<16x16xf32>
    %96 = arith.truncf %95 : vector<16x16xf32> to vector<16x16xbf16>
    %cst_60 = arith.constant dense<0.000000e+00> : vector<32x16xf32>
    %97 = tpu.matmul %93, %96, %cst_60 {dimension_numbers = #tpu.dot_dimension_numbers<[1], [0], [0], [1], [0, 0, 1, 1], [], []>} : vector<32x16xbf16>, vector<16x16xbf16>, vector<32x16xf32> -> vector<32x16xf32>
    %cst_61 = arith.constant 0.000000e+00 : f32
    %98 = vector.broadcast %cst_61 : f32 to vector<32x16xf32>
    %99 = arith.cmpf ogt, %97, %98 : vector<32x16xf32>
    %cst_62 = arith.constant 2.000000e-01 : f32
    %100 = vector.broadcast %cst_62 : f32 to vector<32x16xf32>
    %101 = arith.mulf %100, %97 : vector<32x16xf32>
    %102 = arith.select %99, %97, %101 : vector<32x16xi1>, vector<32x16xf32>
    %103 = arith.truncf %102 : vector<32x16xf32> to vector<32x16xbf16>
    %104 = tpu.concatenate %12, %25, %38, %51, %64, %77, %90, %103 in 1 : vector<32x16xbf16>, vector<32x16xbf16>, vector<32x16xbf16>, vector<32x16xbf16>, vector<32x16xbf16>, vector<32x16xbf16>, vector<32x16xbf16>, vector<32x16xbf16> -> vector<32x128xbf16>
    %c0_63 = arith.constant 0 : index
    %c0_64 = arith.constant 0 : index
    %105 = vector.load %arg3[%c0_63, %c0_64] : memref<32x32xbf16, #tpu.memory_space<vmem>>, vector<32x32xbf16>
    %cst_65 = arith.constant dense<0.000000e+00> : vector<32x128xf32>
    %106 = tpu.matmul %105, %104, %cst_65 {dimension_numbers = #tpu.dot_dimension_numbers<[1], [0], [0], [1], [0, 0, 1, 1], [], []>} : vector<32x32xbf16>, vector<32x128xbf16>, vector<32x128xf32> -> vector<32x128xf32>
    %c0_66 = arith.constant 0 : index
    %c0_67 = arith.constant 0 : index
    %107 = vector.load %arg4[%c0_66, %c0_67] : memref<32x1xf32, #tpu.memory_space<vmem>>, vector<32x1xf32>
    %108 = vector.broadcast %107 : vector<32x1xf32> to vector<32x128xf32>
    %109 = arith.addf %106, %108 : vector<32x128xf32>
    %cst_68 = arith.constant 0.000000e+00 : f32
    %110 = vector.broadcast %cst_68 : f32 to vector<32x128xf32>
    %111 = arith.cmpf ogt, %109, %110 : vector<32x128xf32>
    %cst_69 = arith.constant 2.000000e-01 : f32
    %112 = vector.broadcast %cst_69 : f32 to vector<32x128xf32>
    %113 = arith.mulf %112, %109 : vector<32x128xf32>
    %114 = arith.select %111, %109, %113 : vector<32x128xi1>, vector<32x128xf32>
    %c0_70 = arith.constant 0 : index
    %c0_71 = arith.constant 0 : index
    %c0_72 = arith.constant 0 : index
    %115 = vector.load %arg5[%c0_70, %c0_71, %c0_72] : memref<1x32x128xf32, #tpu.memory_space<vmem>>, vector<1x32x128xf32>
    %116 = vector.shape_cast %115 : vector<1x32x128xf32> to vector<32x128xf32>
    %117 = vector.shape_cast %114 : vector<32x128xf32> to vector<1x32x128xf32>
    tpu.vector_store %arg5[%c0_70, %c0_71, %c0_72], %117 {strides = array<i32>} : memref<1x32x128xf32, #tpu.memory_space<vmem>>, vector<1x32x128xf32>,
    return
  }
  func.func @transform_0(%arg0: i32) -> (i32, i32, i32) {
    %c0_i32 = arith.constant 0 : i32
    %c0_i32_0 = arith.constant 0 : i32
    %c0_i32_1 = arith.constant 0 : i32
    return %arg0, %c0_i32, %c0_i32_0 : i32, i32, i32
  }
  func.func @transform_1(%arg0: i32) -> (i32, i32, i32) {
    %c0_i32 = arith.constant 0 : i32
    %c0_i32_0 = arith.constant 0 : i32
    %c0_i32_1 = arith.constant 0 : i32
    return %arg0, %c0_i32, %c0_i32_0 : i32, i32, i32
  }
  func.func @transform_2(%arg0: i32) -> (i32, i32) {
    %c0_i32 = arith.constant 0 : i32
    %c0_i32_0 = arith.constant 0 : i32
    %c0_i32_1 = arith.constant 0 : i32
    return %c0_i32, %c0_i32_0 : i32, i32
  }
  func.func @transform_3(%arg0: i32) -> (i32, i32) {
    %c0_i32 = arith.constant 0 : i32
    %c0_i32_0 = arith.constant 0 : i32
    %c0_i32_1 = arith.constant 0 : i32
    return %c0_i32, %c0_i32_0 : i32, i32
  }
  func.func @transform_4(%arg0: i32) -> (i32, i32, i32) {
    %c0_i32 = arith.constant 0 : i32
    %c0_i32_0 = arith.constant 0 : i32
    %c0_i32_1 = arith.constant 0 : i32
    return %arg0, %c0_i32, %c0_i32_0 : i32, i32, i32
  }
}

</mosaic_0001>

<llo_original>
// kernel: tpu_custom_call.1
$region0: #{tpu_custom_call.1}
  #allocation0 [shape = 'u32[]', space=smem, size = 0x4, offset = 0x4, fixed_abs, tag = 'smem constant byte address 0x4 - core index']
  #allocation1 [shape = 'u32[72,128]{1,0:T(1,128)}', space=vmem, size = 0x9000, scoped, tag = 'internal scratch']
  %s0 = inlined_call_operand.vmem [shape: f32[16,32,16], index: 0, kind: input, shape index: {}]
  %s1 = inlined_call_operand.vmem [shape: f32[16,16,16], index: 1, kind: input, shape index: {}]
  %s2 = inlined_call_operand.vmem [shape: bf16[32,32], index: 2, kind: input, shape index: {}]
  %s3 = inlined_call_operand.vmem [shape: f32[32,1], index: 3, kind: input, shape index: {}]
  %s4 = inlined_call_operand.hbm [shape: f32[2,32,128], index: 4, kind: output, shape index: {}]
  %s5 = sld [smem:[#allocation0]]
  $region49: #{tpu_custom_call.1} parent=0
    _
  %s7 = ssub.s32 1, %s5
  %s8 = scalar_select 0, %s7, %s5
  $region1: #{tpu_custom_call.1} parent=0
    #allocation2 [shape = 'u8[32768]{0}', space=vmem, size = 0x8000, scoped, tag = 'output window, operand 0']
    #allocation3 [shape = 's32[2]{0}', space=sflag, size = 0x8, scoped, tag = 'scoped memory for tpu_custom_call.1']
    %9 = vsyncpa [#allocation3], 0
    %s10 = scalar_lea.sflag [#allocation3], 1
    %11 = vsyncpa %s10, 0
    loop: start=0, step=1, limit=4
    $region2: #{tpu_custom_call.1} parent=1 // loop_pre_header
      _
    $region3: #{tpu_custom_call.1} parent=1 // loop_header
      %s13 = sphi 0, %s17
      %p14 = scmp.ge.s32.totalorder %s13, 4
      %s23 = sphi 0, %s25
      %s26 = sphi 0, %s23
      %s27 = sphi 0, %s26
      %s43 = sphi 0, %s27
      %s49 = sphi 0, %s51
      %s52 = sphi 0, %s49
      %s53 = sphi 0, %s52
      %s69 = sphi 0, %s53
      %s73 = sphi 0, %s73
      %s75 = sphi 0, %s73
      %s76 = sphi 0, %s75
      %s90 = sphi 0, %s76
      %s94 = sphi 0, %s94
      %s96 = sphi 0, %s94
      %s97 = sphi 0, %s96
      %s111 = sphi 0, %s97
      %s117 = sphi 0, %s119
      %s120 = sphi 0, %s117
      %s121 = sphi 0, %s120
      %s137 = sphi 0, %s121
    $region4: #{tpu_custom_call.1} parent=1 // loop_header_branch
      %16 = sbr.rel (%p14) target = $region8
    $region5: #{tpu_custom_call.1} parent=1 // loop_body
      %s18 = ssub.s32 %s13, 1
      %s19 = ssub.s32 %s13, 2
      %s20 = sadd.s32 %s13, 1
      %s21 = ssub.s32 %s13, %s20
      %p22 = scmp.eq.s32.totalorder %s21, 0
      %s24 = sadd.s32 %s23, 1
      %s25 = scalar_select %p22, %s23, %s24
      %p28 = pneg %p22
      %p29 = scmp.eq.s32.totalorder %s13, 1
      %p30 = por %p28, %p29
      %p31 = scmp.ne.s32.totalorder %s23, %s26
      %p32 = scmp.eq.s32.totalorder %s13, 0
      %p33 = por %p31, %p32
      %p34 = scmp.ne.s32.totalorder %s23, %s26
      %p35 = scmp.eq.s32.totalorder %s18, 1
      %p36 = por %p34, %p35
      %p37 = scmp.ne.s32.totalorder %s26, %s27
      %p38 = scmp.eq.s32.totalorder %s18, 0
      %p39 = por %p37, %p38
      %p40 = scmp.ne.s32.totalorder %s26, %s27
      %p41 = scmp.eq.s32.totalorder %s19, 1
      %p42 = por %p40, %p41
      %p44 = scmp.ne.s32.totalorder %s27, %s43
      %p45 = scmp.eq.s32.totalorder %s19, 0
      %p46 = por %p44, %p45
      %s47 = ssub.s32 %s13, %s20
      %p48 = scmp.eq.s32.totalorder %s47, 0
      %s50 = sadd.s32 %s49, 1
      %s51 = scalar_select %p48, %s49, %s50
      %p54 = pneg %p48
      %p55 = scmp.eq.s32.totalorder %s13, 1
      %p56 = por %p54, %p55
      %p57 = scmp.ne.s32.totalorder %s49, %s52
      %p58 = scmp.eq.s32.totalorder %s13, 0
      %p59 = por %p57, %p58
      %p60 = scmp.ne.s32.totalorder %s49, %s52
      %p61 = scmp.eq.s32.totalorder %s18, 1
      %p62 = por %p60, %p61
      %p63 = scmp.ne.s32.totalorder %s52, %s53
      %p64 = scmp.eq.s32.totalorder %s18, 0
      %p65 = por %p63, %p64
      %p66 = scmp.ne.s32.totalorder %s52, %s53
      %p67 = scmp.eq.s32.totalorder %s19, 1
      %p68 = por %p66, %p67
      %p70 = scmp.ne.s32.totalorder %s53, %s69
      %p71 = scmp.eq.s32.totalorder %s19, 0
      %p72 = por %p70, %p71
      %s74 = sadd.s32 %s73, 1
      %p77 = scmp.eq.s32.totalorder %s13, 1
      %p78 = scmp.ne.s32.totalorder %s73, %s75
      %p79 = scmp.eq.s32.totalorder %s13, 0
      %p80 = por %p78, %p79
      %p81 = scmp.ne.s32.totalorder %s73, %s75
      %p82 = scmp.eq.s32.totalorder %s18, 1
      %p83 = por %p81, %p82
      %p84 = scmp.ne.s32.totalorder %s75, %s76
      %p85 = scmp.eq.s32.totalorder %s18, 0
      %p86 = por %p84, %p85
      %p87 = scmp.ne.s32.totalorder %s75, %s76
      %p88 = scmp.eq.s32.totalorder %s19, 1
      %p89 = por %p87, %p88
      %p91 = scmp.ne.s32.totalorder %s76, %s90
      %p92 = scmp.eq.s32.totalorder %s19, 0
      %p93 = por %p91, %p92
      %s95 = sadd.s32 %s94, 1
      %p98 = scmp.eq.s32.totalorder %s13, 1
      %p99 = scmp.ne.s32.totalorder %s94, %s96
      %p100 = scmp.eq.s32.totalorder %s13, 0
      %p101 = por %p99, %p100
      %p102 = scmp.ne.s32.totalorder %s94, %s96
      %p103 = scmp.eq.s32.totalorder %s18, 1
      %p104 = por %p102, %p103
      %p105 = scmp.ne.s32.totalorder %s96, %s97
      %p106 = scmp.eq.s32.totalorder %s18, 0
      %p107 = por %p105, %p106
      %p108 = scmp.ne.s32.totalorder %s96, %s97
      %p109 = scmp.eq.s32.totalorder %s19, 1
      %p110 = por %p108, %p109
      %p112 = scmp.ne.s32.totalorder %s97, %s111
      %p113 = scmp.eq.s32.totalorder %s19, 0
      %p114 = por %p112, %p113
      %s115 = ssub.s32 %s13, %s20
      %p116 = scmp.eq.s32.totalorder %s115, 0
      %s118 = sadd.s32 %s117, 1
      %s119 = scalar_select %p116, %s117, %s118
      %p122 = pneg %p116
      %p123 = scmp.eq.s32.totalorder %s13, 1
      %p124 = por %p122, %p123
      %p125 = scmp.ne.s32.totalorder %s117, %s120
      %p126 = scmp.eq.s32.totalorder %s13, 0
      %p127 = por %p125, %p126
      %p128 = scmp.ne.s32.totalorder %s117, %s120
      %p129 = scmp.eq.s32.totalorder %s18, 1
      %p130 = por %p128, %p129
      %p131 = scmp.ne.s32.totalorder %s120, %s121
      %p132 = scmp.eq.s32.totalorder %s18, 0
      %p133 = por %p131, %p132
      %p134 = scmp.ne.s32.totalorder %s120, %s121
      %p135 = scmp.eq.s32.totalorder %s19, 1
      %p136 = por %p134, %p135
      %p138 = scmp.ne.s32.totalorder %s121, %s137
      %p139 = scmp.eq.s32.totalorder %s19, 0
      %p140 = por %p138, %p139
      %p141 = scmp.le.s32.totalorder 1, %s13
      %p142 = scmp.lt.s32.totalorder %s13, 3
      %p143 = pnand %p141, %p142
      %p144 = pneg %p143
      // Predicated region
      $region9: #{tpu_custom_call.1} parent=5 // pred_check
        _
      $region10: #{tpu_custom_call.1} parent=5 // pred_check_branch
        %146 = sbr.rel (%p143) target = $region12
      $region11: #{tpu_custom_call.1} parent=5 // pred_region
        %s147 = ssub.s32 %s13, 1
        // Predicated region
        $region13: #{tpu_custom_call.1} parent=11 // pred_check
          %p148 = pneg %p86
        $region14: #{tpu_custom_call.1} parent=11 // pred_check_branch
          %150 = sbr.rel (%p148) target = $region16
        $region15: #{tpu_custom_call.1} parent=11 // pred_region
          _
        $region16: #{tpu_custom_call.1} parent=11 // pred_fallthru
          _
        // Predicated region
        $region17: #{tpu_custom_call.1} parent=11 // pred_check
          %p151 = pneg %p107
        $region18: #{tpu_custom_call.1} parent=11 // pred_check_branch
          %153 = sbr.rel (%p151) target = $region20
        $region19: #{tpu_custom_call.1} parent=11 // pred_region
          _
        $region20: #{tpu_custom_call.1} parent=11 // pred_fallthru
          _
      $region12: #{tpu_custom_call.1} parent=5 // pred_fallthru
        _
      %p154 = scmp.lt.s32.totalorder %s13, 2
      // Predicated region
      $region21: #{tpu_custom_call.1} parent=5 // pred_check
        %p155 = pneg %p154
      $region22: #{tpu_custom_call.1} parent=5 // pred_check_branch
        %157 = sbr.rel (%p155) target = $region24
      $region23: #{tpu_custom_call.1} parent=5 // pred_region
        // Predicated region
        $region25: #{tpu_custom_call.1} parent=23 // pred_check
          %p158 = pneg %p33
        $region26: #{tpu_custom_call.1} parent=23 // pred_check_branch
          %160 = sbr.rel (%p158) target = $region28
        $region27: #{tpu_custom_call.1} parent=23 // pred_region
          %s161 = smul.u32 8, %s13
          %p162 = scmp.lt.s32.totalorder %s161, 15
          %s163 = scalar_select %p162, %s161, 15
          %s164 = smul.addr %s163, 4
          %s165 = smul.addr %s164, 8
          %s166 = scalar_lea.vmem %s0, %s165
          %s167 = smul.u32 8, %s13
        $region28: #{tpu_custom_call.1} parent=23 // pred_fallthru
          _
        // Predicated region
        $region29: #{tpu_custom_call.1} parent=23 // pred_check
          %p168 = pneg %p59
        $region30: #{tpu_custom_call.1} parent=23 // pred_check_branch
          %170 = sbr.rel (%p168) target = $region32
        $region31: #{tpu_custom_call.1} parent=23 // pred_region
          %s171 = smul.u32 8, %s13
          %p172 = scmp.lt.s32.totalorder %s171, 15
          %s173 = scalar_select %p172, %s171, 15
          %s174 = smul.addr %s173, 2
          %s175 = smul.addr %s174, 8
          %s176 = scalar_lea.vmem %s1, %s175
          %s177 = smul.u32 8, %s13
        $region32: #{tpu_custom_call.1} parent=23 // pred_fallthru
          _
      $region24: #{tpu_custom_call.1} parent=5 // pred_fallthru
        _
      %p178 = scmp.le.s32.totalorder 1, %s13
      %p179 = scmp.lt.s32.totalorder %s13, 3
      %p180 = pnand %p178, %p179
      %p181 = pneg %p180
      // Predicated region
      $region33: #{tpu_custom_call.1} parent=5 // pred_check
        _
      $region34: #{tpu_custom_call.1} parent=5 // pred_check_branch
        %183 = sbr.rel (%p180) target = $region36
      $region35: #{tpu_custom_call.1} parent=5 // pred_region
        %s184 = ssub.s32 %s13, 1
        %s185 = smul.u32 8, %s18
        %p186 = scmp.lt.s32.totalorder %s185, 15
        %s187 = scalar_select %p186, %s185, 15
        %s188 = smul.addr %s187, 4
        %s189 = smul.addr %s188, 8
        %s190 = scalar_lea.vmem %s0, %s189
        %p191 = pneg %p39
        %p192 = pneg %p36
        %s193 = smul.u32 8, %s18
        %p194 = scmp.lt.s32.totalorder %s193, 15
        %s195 = scalar_select %p194, %s193, 15
        %s196 = smul.addr %s195, 2
        %s197 = smul.addr %s196, 8
        %s198 = scalar_lea.vmem %s1, %s197
        %p199 = pneg %p65
        %p200 = pneg %p62
        %p201 = pneg %p86
        %p202 = pneg %p83
        %p203 = pneg %p107
        %p204 = pneg %p104
        %p205 = pneg %p133
        %p206 = pneg %p130
        %s207 = sand.u32 %s120, 1
        %s208 = scalar_lea.sflag [#allocation3], %s207
        %s209 = sand.u32 %s120, 1
        %s210 = smul.addr %s209, 32
        %s211 = scalar_lea.vmem [#allocation2], %s210
        %s212 = smul.u32 8, %s18
        %p213 = scmp.lt.s32.totalorder %s212, 15
        %s214 = scalar_select %p213, %s212, 15
        %s215 = smul.addr %s214, 4
        %s216 = smul.addr %s215, 8
        %s217 = scalar_lea.vmem %s0, %s216
        %s218 = smul.u32 8, %s18
        %s219 = smul.u32 8, %s18
        %p220 = scmp.lt.s32.totalorder %s219, 15
        %s221 = scalar_select %p220, %s219, 15
        %s222 = smul.addr %s221, 2
        %s223 = smul.addr %s222, 8
        %s224 = scalar_lea.vmem %s1, %s223
        %s225 = smul.u32 8, %s18
        %v227 = vld [vmem:[%s217] sm:$0xff]
        %v228 = vld [vmem:[%s217 + $0x8] sm:$0xff]
        %v229 = vld [vmem:[%s217 + $0x10] sm:$0xff]
        %v230 = vld [vmem:[%s217 + $0x18] sm:$0xff]
        %v231 = vpack.c.bf16 %v228, %v227
        %v232 = vpack.c.bf16 %v230, %v229
        %v233 = vld [vmem:[%s224] sm:$0xff]
        %v234 = vld [vmem:[%s224 + $0x8] sm:$0xff]
        %v235 = vpack.c.bf16 %v234, %v233
        %vm236 = vcmask 130048
        %v238 = vsel %vm236, %v231, 0
        %v241 = vsel %vm236, %v232, 0
        %243 = vmatpush.bf16.msra.mxu0 0
        %244 = vmatpush.bf16.msra.mxu0 0
        %245 = vmatpush.bf16.msra.mxu0 0
        %246 = vmatpush.bf16.msra.mxu0 0
        %247 = vmatpush.bf16.msra.mxu0 0
        %248 = vmatpush.bf16.msra.mxu0 0
        %249 = vmatpush.bf16.msra.mxu0 0
        %250 = vmatpush.bf16.msra.mxu0 %v235
        %251 = vmatmul.bf16.gmra.mxu0 %v238
        %v252 = vpop.f32.mrf.mxu0
        %v253 = vadd.f32 0.0, %v252
        %v254 = vpop.f32.mrf.mxu0
        %v255 = vadd.f32 0.0, %v254
        %256 = vmatmul.bf16.gmra.mxu0 %v241
        %v257 = vpop.f32.mrf.mxu0
        %v258 = vadd.f32 0.0, %v257
        %v259 = vpop.f32.mrf.mxu0
        %v260 = vadd.f32 0.0, %v259
        %261 = vdwg.mxu0
        %vm262 = vcmp.gt.f32.partialorder %v253, 0.0
        %vm263 = vcmp.gt.f32.partialorder %v255, 0.0
        %vm264 = vcmp.gt.f32.partialorder %v258, 0.0
        %vm265 = vcmp.gt.f32.partialorder %v260, 0.0
        %v266 = vmul.f32 %v253, 0.2
        %v267 = vmul.f32 %v255, 0.2
        %v268 = vmul.f32 %v258, 0.2
        %v269 = vmul.f32 %v260, 0.2
        %v270 = vsel %vm262, %v253, %v266
        %v271 = vsel %vm263, %v255, %v267
        %v272 = vsel %vm264, %v258, %v268
        %v273 = vsel %vm265, %v260, %v269
        %v274 = vpack.c.bf16 %v270, %v270
        %v275 = vpack.c.bf16 %v271, %v271
        %v276 = vpack.c.bf16 %v272, %v272
        %v277 = vpack.c.bf16 %v273, %v273
        %s278 = scalar_lea.vmem %s217, 32
        %v279 = vld [vmem:[%s278] sm:$0xff]
        %v280 = vld [vmem:[%s278 + $0x8] sm:$0xff]
        %v281 = vld [vmem:[%s278 + $0x10] sm:$0xff]
        %v282 = vld [vmem:[%s278 + $0x18] sm:$0xff]
        %v283 = vpack.c.bf16 %v280, %v279
        %v284 = vpack.c.bf16 %v282, %v281
        %s285 = scalar_lea.vmem %s224, 16
        %v286 = vld [vmem:[%s285] sm:$0xff]
        %v287 = vld [vmem:[%s285 + $0x8] sm:$0xff]
        %v288 = vpack.c.bf16 %v287, %v286
        %v290 = vsel %vm236, %v283, 0
        %v293 = vsel %vm236, %v284, 0
        %295 = vmatpush.bf16.msra.mxu0 0
        %296 = vmatpush.bf16.msra.mxu0 0
        %297 = vmatpush.bf16.msra.mxu0 0
        %298 = vmatpush.bf16.msra.mxu0 0
        %299 = vmatpush.bf16.msra.mxu0 0
        %300 = vmatpush.bf16.msra.mxu0 0
        %301 = vmatpush.bf16.msra.mxu0 0
        %302 = vmatpush.bf16.msra.mxu0 %v288
        %303 = vmatmul.bf16.gmra.mxu0 %v290
        %v304 = vpop.f32.mrf.mxu0
        %v305 = vadd.f32 0.0, %v304
        %v306 = vpop.f32.mrf.mxu0
        %v307 = vadd.f32 0.0, %v306
        %308 = vmatmul.bf16.gmra.mxu0 %v293
        %v309 = vpop.f32.mrf.mxu0
        %v310 = vadd.f32 0.0, %v309
        %v311 = vpop.f32.mrf.mxu0
        %v312 = vadd.f32 0.0, %v311
        %313 = vdwg.mxu0
        %vm314 = vcmp.gt.f32.partialorder %v305, 0.0
        %vm315 = vcmp.gt.f32.partialorder %v307, 0.0
        %vm316 = vcmp.gt.f32.partialorder %v310, 0.0
        %vm317 = vcmp.gt.f32.partialorder %v312, 0.0
        %v318 = vmul.f32 %v305, 0.2
        %v319 = vmul.f32 %v307, 0.2
        %v320 = vmul.f32 %v310, 0.2
        %v321 = vmul.f32 %v312, 0.2
        %v322 = vsel %vm314, %v305, %v318
        %v323 = vsel %vm315, %v307, %v319
        %v324 = vsel %vm316, %v310, %v320
        %v325 = vsel %vm317, %v312, %v321
        %v326 = vpack.c.bf16 %v322, %v322
        %v327 = vpack.c.bf16 %v323, %v323
        %v328 = vpack.c.bf16 %v324, %v324
        %v329 = vpack.c.bf16 %v325, %v325
        %s330 = scalar_lea.vmem %s217, 64
        %v331 = vld [vmem:[%s330] sm:$0xff]
        %v332 = vld [vmem:[%s330 + $0x8] sm:$0xff]
        %v333 = vld [vmem:[%s330 + $0x10] sm:$0xff]
        %v334 = vld [vmem:[%s330 + $0x18] sm:$0xff]
        %v335 = vpack.c.bf16 %v332, %v331
        %v336 = vpack.c.bf16 %v334, %v333
        %s337 = scalar_lea.vmem %s224, 32
        %v338 = vld [vmem:[%s337] sm:$0xff]
        %v339 = vld [vmem:[%s337 + $0x8] sm:$0xff]
        %v340 = vpack.c.bf16 %v339, %v338
        %v342 = vsel %vm236, %v335, 0
        %v345 = vsel %vm236, %v336, 0
        %347 = vmatpush.bf16.msra.mxu0 0
        %348 = vmatpush.bf16.msra.mxu0 0
        %349 = vmatpush.bf16.msra.mxu0 0
        %350 = vmatpush.bf16.msra.mxu0 0
        %351 = vmatpush.bf16.msra.mxu0 0
        %352 = vmatpush.bf16.msra.mxu0 0
        %353 = vmatpush.bf16.msra.mxu0 0
        %354 = vmatpush.bf16.msra.mxu0 %v340
        %355 = vmatmul.bf16.gmra.mxu0 %v342
        %v356 = vpop.f32.mrf.mxu0
        %v357 = vadd.f32 0.0, %v356
        %v358 = vpop.f32.mrf.mxu0
        %v359 = vadd.f32 0.0, %v358
        %360 = vmatmul.bf16.gmra.mxu0 %v345
        %v361 = vpop.f32.mrf.mxu0
        %v362 = vadd.f32 0.0, %v361
        %v363 = vpop.f32.mrf.mxu0
        %v364 = vadd.f32 0.0, %v363
        %365 = vdwg.mxu0
        %vm366 = vcmp.gt.f32.partialorder %v357, 0.0
        %vm367 = vcmp.gt.f32.partialorder %v359, 0.0
        %vm368 = vcmp.gt.f32.partialorder %v362, 0.0
        %vm369 = vcmp.gt.f32.partialorder %v364, 0.0
        %v370 = vmul.f32 %v357, 0.2
        %v371 = vmul.f32 %v359, 0.2
        %v372 = vmul.f32 %v362, 0.2
        %v373 = vmul.f32 %v364, 0.2
        %v374 = vsel %vm366, %v357, %v370
        %v375 = vsel %vm367, %v359, %v371
        %v376 = vsel %vm368, %v362, %v372
        %v377 = vsel %vm369, %v364, %v373
        %v378 = vpack.c.bf16 %v374, %v374
        %v379 = vpack.c.bf16 %v375, %v375
        %v380 = vpack.c.bf16 %v376, %v376
        %v381 = vpack.c.bf16 %v377, %v377
        %s382 = scalar_lea.vmem %s217, 96
        %v383 = vld [vmem:[%s382] sm:$0xff]
        %v384 = vld [vmem:[%s382 + $0x8] sm:$0xff]
        %v385 = vld [vmem:[%s382 + $0x10] sm:$0xff]
        %v386 = vld [vmem:[%s382 + $0x18] sm:$0xff]
        %v387 = vpack.c.bf16 %v384, %v383
        %v388 = vpack.c.bf16 %v386, %v385
        %s389 = scalar_lea.vmem %s224, 48
        %v390 = vld [vmem:[%s389] sm:$0xff]
        %v391 = vld [vmem:[%s389 + $0x8] sm:$0xff]
        %v392 = vpack.c.bf16 %v391, %v390
        %v394 = vsel %vm236, %v387, 0
        %v397 = vsel %vm236, %v388, 0
        %399 = vmatpush.bf16.msra.mxu0 0
        %400 = vmatpush.bf16.msra.mxu0 0
        %401 = vmatpush.bf16.msra.mxu0 0
        %402 = vmatpush.bf16.msra.mxu0 0
        %403 = vmatpush.bf16.msra.mxu0 0
        %404 = vmatpush.bf16.msra.mxu0 0
        %405 = vmatpush.bf16.msra.mxu0 0
        %406 = vmatpush.bf16.msra.mxu0 %v392
        %407 = vmatmul.bf16.gmra.mxu0 %v394
        %v408 = vpop.f32.mrf.mxu0
        %v409 = vadd.f32 0.0, %v408
        %v410 = vpop.f32.mrf.mxu0
        %v411 = vadd.f32 0.0, %v410
        %412 = vmatmul.bf16.gmra.mxu0 %v397
        %v413 = vpop.f32.mrf.mxu0
        %v414 = vadd.f32 0.0, %v413
        %v415 = vpop.f32.mrf.mxu0
        %v416 = vadd.f32 0.0, %v415
        %417 = vdwg.mxu0
        %vm418 = vcmp.gt.f32.partialorder %v409, 0.0
        %vm419 = vcmp.gt.f32.partialorder %v411, 0.0
        %vm420 = vcmp.gt.f32.partialorder %v414, 0.0
        %vm421 = vcmp.gt.f32.partialorder %v416, 0.0
        %v422 = vmul.f32 %v409, 0.2
        %v423 = vmul.f32 %v411, 0.2
        %v424 = vmul.f32 %v414, 0.2
        %v425 = vmul.f32 %v416, 0.2
        %v426 = vsel %vm418, %v409, %v422
        %v427 = vsel %vm419, %v411, %v423
        %v428 = vsel %vm420, %v414, %v424
        %v429 = vsel %vm421, %v416, %v425
        %v430 = vpack.c.bf16 %v426, %v426
        %v431 = vpack.c.bf16 %v427, %v427
        %v432 = vpack.c.bf16 %v428, %v428
        %v433 = vpack.c.bf16 %v429, %v429
        %s434 = scalar_lea.vmem %s217, 128
        %v435 = vld [vmem:[%s434] sm:$0xff]
        %v436 = vld [vmem:[%s434 + $0x8] sm:$0xff]
        %v437 = vld [vmem:[%s434 + $0x10] sm:$0xff]
        %v438 = vld [vmem:[%s434 + $0x18] sm:$0xff]
        %v439 = vpack.c.bf16 %v436, %v435
        %v440 = vpack.c.bf16 %v438, %v437
        %s441 = scalar_lea.vmem %s224, 64
        %v442 = vld [vmem:[%s441] sm:$0xff]
        %v443 = vld [vmem:[%s441 + $0x8] sm:$0xff]
        %v444 = vpack.c.bf16 %v443, %v442
        %v446 = vsel %vm236, %v439, 0
        %v449 = vsel %vm236, %v440, 0
        %451 = vmatpush.bf16.msra.mxu0 0
        %452 = vmatpush.bf16.msra.mxu0 0
        %453 = vmatpush.bf16.msra.mxu0 0
        %454 = vmatpush.bf16.msra.mxu0 0
        %455 = vmatpush.bf16.msra.mxu0 0
        %456 = vmatpush.bf16.msra.mxu0 0
        %457 = vmatpush.bf16.msra.mxu0 0
        %458 = vmatpush.bf16.msra.mxu0 %v444
        %459 = vmatmul.bf16.gmra.mxu0 %v446
        %v460 = vpop.f32.mrf.mxu0
        %v461 = vadd.f32 0.0, %v460
        %v462 = vpop.f32.mrf.mxu0
        %v463 = vadd.f32 0.0, %v462
        %464 = vmatmul.bf16.gmra.mxu0 %v449
        %v465 = vpop.f32.mrf.mxu0
        %v466 = vadd.f32 0.0, %v465
        %v467 = vpop.f32.mrf.mxu0
        %v468 = vadd.f32 0.0, %v467
        %469 = vdwg.mxu0
        %vm470 = vcmp.gt.f32.partialorder %v461, 0.0
        %vm471 = vcmp.gt.f32.partialorder %v463, 0.0
        %vm472 = vcmp.gt.f32.partialorder %v466, 0.0
        %vm473 = vcmp.gt.f32.partialorder %v468, 0.0
        %v474 = vmul.f32 %v461, 0.2
        %v475 = vmul.f32 %v463, 0.2
        %v476 = vmul.f32 %v466, 0.2
        %v477 = vmul.f32 %v468, 0.2
        %v478 = vsel %vm470, %v461, %v474
        %v479 = vsel %vm471, %v463, %v475
        %v480 = vsel %vm472, %v466, %v476
        %v481 = vsel %vm473, %v468, %v477
        %v482 = vpack.c.bf16 %v478, %v478
        %v483 = vpack.c.bf16 %v479, %v479
        %v484 = vpack.c.bf16 %v480, %v480
        %v485 = vpack.c.bf16 %v481, %v481
        %s486 = scalar_lea.vmem %s217, 160
        %v487 = vld [vmem:[%s486] sm:$0xff]
        %v488 = vld [vmem:[%s486 + $0x8] sm:$0xff]
        %v489 = vld [vmem:[%s486 + $0x10] sm:$0xff]
        %v490 = vld [vmem:[%s486 + $0x18] sm:$0xff]
        %v491 = vpack.c.bf16 %v488, %v487
        %v492 = vpack.c.bf16 %v490, %v489
        %s493 = scalar_lea.vmem %s224, 80
        %v494 = vld [vmem:[%s493] sm:$0xff]
        %v495 = vld [vmem:[%s493 + $0x8] sm:$0xff]
        %v496 = vpack.c.bf16 %v495, %v494
        %v498 = vsel %vm236, %v491, 0
        %v501 = vsel %vm236, %v492, 0
        %503 = vmatpush.bf16.msra.mxu0 0
        %504 = vmatpush.bf16.msra.mxu0 0
        %505 = vmatpush.bf16.msra.mxu0 0
        %506 = vmatpush.bf16.msra.mxu0 0
        %507 = vmatpush.bf16.msra.mxu0 0
        %508 = vmatpush.bf16.msra.mxu0 0
        %509 = vmatpush.bf16.msra.mxu0 0
        %510 = vmatpush.bf16.msra.mxu0 %v496
        %511 = vmatmul.bf16.gmra.mxu0 %v498
        %v512 = vpop.f32.mrf.mxu0
        %v513 = vadd.f32 0.0, %v512
        %v514 = vpop.f32.mrf.mxu0
        %v515 = vadd.f32 0.0, %v514
        %516 = vmatmul.bf16.gmra.mxu0 %v501
        %v517 = vpop.f32.mrf.mxu0
        %v518 = vadd.f32 0.0, %v517
        %v519 = vpop.f32.mrf.mxu0
        %v520 = vadd.f32 0.0, %v519
        %521 = vdwg.mxu0
        %vm522 = vcmp.gt.f32.partialorder %v513, 0.0
        %vm523 = vcmp.gt.f32.partialorder %v515, 0.0
        %vm524 = vcmp.gt.f32.partialorder %v518, 0.0
        %vm525 = vcmp.gt.f32.partialorder %v520, 0.0
        %v526 = vmul.f32 %v513, 0.2
        %v527 = vmul.f32 %v515, 0.2
        %v528 = vmul.f32 %v518, 0.2
        %v529 = vmul.f32 %v520, 0.2
        %v530 = vsel %vm522, %v513, %v526
        %v531 = vsel %vm523, %v515, %v527
        %v532 = vsel %vm524, %v518, %v528
        %v533 = vsel %vm525, %v520, %v529
        %v534 = vpack.c.bf16 %v530, %v530
        %v535 = vpack.c.bf16 %v531, %v531
        %v536 = vpack.c.bf16 %v532, %v532
        %v537 = vpack.c.bf16 %v533, %v533
        %s538 = scalar_lea.vmem %s217, 192
        %v539 = vld [vmem:[%s538] sm:$0xff]
        %v540 = vld [vmem:[%s538 + $0x8] sm:$0xff]
        %v541 = vld [vmem:[%s538 + $0x10] sm:$0xff]
        %v542 = vld [vmem:[%s538 + $0x18] sm:$0xff]
        %v543 = vpack.c.bf16 %v540, %v539
        %v544 = vpack.c.bf16 %v542, %v541
        %s545 = scalar_lea.vmem %s224, 96
        %v546 = vld [vmem:[%s545] sm:$0xff]
        %v547 = vld [vmem:[%s545 + $0x8] sm:$0xff]
        %v548 = vpack.c.bf16 %v547, %v546
        %v550 = vsel %vm236, %v543, 0
        %v553 = vsel %vm236, %v544, 0
        %555 = vmatpush.bf16.msra.mxu0 0
        %556 = vmatpush.bf16.msra.mxu0 0
        %557 = vmatpush.bf16.msra.mxu0 0
        %558 = vmatpush.bf16.msra.mxu0 0
        %559 = vmatpush.bf16.msra.mxu0 0
        %560 = vmatpush.bf16.msra.mxu0 0
        %561 = vmatpush.bf16.msra.mxu0 0
        %562 = vmatpush.bf16.msra.mxu0 %v548
        %563 = vmatmul.bf16.gmra.mxu0 %v550
        %v564 = vpop.f32.mrf.mxu0
        %v565 = vadd.f32 0.0, %v564
        %v566 = vpop.f32.mrf.mxu0
        %v567 = vadd.f32 0.0, %v566
        %568 = vmatmul.bf16.gmra.mxu0 %v553
        %v569 = vpop.f32.mrf.mxu0
        %v570 = vadd.f32 0.0, %v569
        %v571 = vpop.f32.mrf.mxu0
        %v572 = vadd.f32 0.0, %v571
        %573 = vdwg.mxu0
        %vm574 = vcmp.gt.f32.partialorder %v565, 0.0
        %vm575 = vcmp.gt.f32.partialorder %v567, 0.0
        %vm576 = vcmp.gt.f32.partialorder %v570, 0.0
        %vm577 = vcmp.gt.f32.partialorder %v572, 0.0
        %v578 = vmul.f32 %v565, 0.2
        %v579 = vmul.f32 %v567, 0.2
        %v580 = vmul.f32 %v570, 0.2
        %v581 = vmul.f32 %v572, 0.2
        %v582 = vsel %vm574, %v565, %v578
        %v583 = vsel %vm575, %v567, %v579
        %v584 = vsel %vm576, %v570, %v580
        %v585 = vsel %vm577, %v572, %v581
        %v586 = vpack.c.bf16 %v582, %v582
        %v587 = vpack.c.bf16 %v583, %v583
        %v588 = vpack.c.bf16 %v584, %v584
        %v589 = vpack.c.bf16 %v585, %v585
        %s590 = scalar_lea.vmem %s217, 224
        %v591 = vld [vmem:[%s590] sm:$0xff]
        %v592 = vld [vmem:[%s590 + $0x8] sm:$0xff]
        %v593 = vld [vmem:[%s590 + $0x10] sm:$0xff]
        %v594 = vld [vmem:[%s590 + $0x18] sm:$0xff]
        %v595 = vpack.c.bf16 %v592, %v591
        %v596 = vpack.c.bf16 %v594, %v593
        %s597 = scalar_lea.vmem %s224, 112
        %v598 = vld [vmem:[%s597] sm:$0xff]
        %v599 = vld [vmem:[%s597 + $0x8] sm:$0xff]
        %v600 = vpack.c.bf16 %v599, %v598
        %v602 = vsel %vm236, %v595, 0
        %v605 = vsel %vm236, %v596, 0
        %607 = vmatpush.bf16.msra.mxu0 0
        %608 = vmatpush.bf16.msra.mxu0 0
        %609 = vmatpush.bf16.msra.mxu0 0
        %610 = vmatpush.bf16.msra.mxu0 0
        %611 = vmatpush.bf16.msra.mxu0 0
        %612 = vmatpush.bf16.msra.mxu0 0
        %613 = vmatpush.bf16.msra.mxu0 0
        %614 = vmatpush.bf16.msra.mxu0 %v600
        %615 = vmatmul.bf16.gmra.mxu0 %v602
        %v616 = vpop.f32.mrf.mxu0
        %v617 = vadd.f32 0.0, %v616
        %v618 = vpop.f32.mrf.mxu0
        %v619 = vadd.f32 0.0, %v618
        %620 = vmatmul.bf16.gmra.mxu0 %v605
        %v621 = vpop.f32.mrf.mxu0
        %v622 = vadd.f32 0.0, %v621
        %v623 = vpop.f32.mrf.mxu0
        %v624 = vadd.f32 0.0, %v623
        %625 = vdwg.mxu0
        %vm626 = vcmp.gt.f32.partialorder %v617, 0.0
        %vm627 = vcmp.gt.f32.partialorder %v619, 0.0
        %vm628 = vcmp.gt.f32.partialorder %v622, 0.0
        %vm629 = vcmp.gt.f32.partialorder %v624, 0.0
        %v630 = vmul.f32 %v617, 0.2
        %v631 = vmul.f32 %v619, 0.2
        %v632 = vmul.f32 %v622, 0.2
        %v633 = vmul.f32 %v624, 0.2
        %v634 = vsel %vm626, %v617, %v630
        %v635 = vsel %vm627, %v619, %v631
        %v636 = vsel %vm628, %v622, %v632
        %v637 = vsel %vm629, %v624, %v633
        %v638 = vpack.c.bf16 %v634, %v634
        %v639 = vpack.c.bf16 %v635, %v635
        %v640 = vpack.c.bf16 %v636, %v636
        %v641 = vpack.c.bf16 %v637, %v637
        %v646 = vunpack.c.l.b16 %v274
        %v647 = vunpack.c.l.b16 %v275
        %v648 = vunpack.c.l.b16 %v276
        %v649 = vunpack.c.l.b16 %v277
        %v650 = vpack.c.b16 %v647, %v646
        %v651 = vpack.c.b16 %v649, %v648
        %v656 = vunpack.c.l.b16 %v326
        %v657 = vunpack.c.l.b16 %v327
        %v658 = vunpack.c.l.b16 %v328
        %v659 = vunpack.c.l.b16 %v329
        %v660 = vpack.c.b16 %v657, %v656
        %v661 = vpack.c.b16 %v659, %v658
        %662 = vrot.lane.b32.xlu0 %v660, 16
        %v663 = vpop.permute.xlu0 %662
        %664 = vrot.lane.b32.xlu0 %v661, 16
        %v665 = vpop.permute.xlu0 %664
        %v670 = vunpack.c.l.b16 %v378
        %v671 = vunpack.c.l.b16 %v379
        %v672 = vunpack.c.l.b16 %v380
        %v673 = vunpack.c.l.b16 %v381
        %v674 = vpack.c.b16 %v671, %v670
        %v675 = vpack.c.b16 %v673, %v672
        %676 = vrot.lane.b32.xlu0 %v674, 32
        %v677 = vpop.permute.xlu0 %676
        %678 = vrot.lane.b32.xlu0 %v675, 32
        %v679 = vpop.permute.xlu0 %678
        %v684 = vunpack.c.l.b16 %v430
        %v685 = vunpack.c.l.b16 %v431
        %v686 = vunpack.c.l.b16 %v432
        %v687 = vunpack.c.l.b16 %v433
        %v688 = vpack.c.b16 %v685, %v684
        %v689 = vpack.c.b16 %v687, %v686
        %690 = vrot.lane.b32.xlu0 %v688, 48
        %v691 = vpop.permute.xlu0 %690
        %692 = vrot.lane.b32.xlu0 %v689, 48
        %v693 = vpop.permute.xlu0 %692
        %v698 = vunpack.c.l.b16 %v482
        %v699 = vunpack.c.l.b16 %v483
        %v700 = vunpack.c.l.b16 %v484
        %v701 = vunpack.c.l.b16 %v485
        %v702 = vpack.c.b16 %v699, %v698
        %v703 = vpack.c.b16 %v701, %v700
        %704 = vrot.lane.b32.xlu0 %v702, 64
        %v705 = vpop.permute.xlu0 %704
        %706 = vrot.lane.b32.xlu0 %v703, 64
        %v707 = vpop.permute.xlu0 %706
        %v712 = vunpack.c.l.b16 %v534
        %v713 = vunpack.c.l.b16 %v535
        %v714 = vunpack.c.l.b16 %v536
        %v715 = vunpack.c.l.b16 %v537
        %v716 = vpack.c.b16 %v713, %v712
        %v717 = vpack.c.b16 %v715, %v714
        %718 = vrot.lane.b32.xlu0 %v716, 80
        %v719 = vpop.permute.xlu0 %718
        %720 = vrot.lane.b32.xlu0 %v717, 80
        %v721 = vpop.permute.xlu0 %720
        %v726 = vunpack.c.l.b16 %v586
        %v727 = vunpack.c.l.b16 %v587
        %v728 = vunpack.c.l.b16 %v588
        %v729 = vunpack.c.l.b16 %v589
        %v730 = vpack.c.b16 %v727, %v726
        %v731 = vpack.c.b16 %v729, %v728
        %732 = vrot.lane.b32.xlu0 %v730, 96
        %v733 = vpop.permute.xlu0 %732
        %734 = vrot.lane.b32.xlu0 %v731, 96
        %v735 = vpop.permute.xlu0 %734
        %v740 = vunpack.c.l.b16 %v638
        %v741 = vunpack.c.l.b16 %v639
        %v742 = vunpack.c.l.b16 %v640
        %v743 = vunpack.c.l.b16 %v641
        %v744 = vpack.c.b16 %v741, %v740
        %v745 = vpack.c.b16 %v743, %v742
        %746 = vrot.lane.b32.xlu0 %v744, 112
        %v747 = vpop.permute.xlu0 %746
        %748 = vrot.lane.b32.xlu0 %v745, 112
        %v749 = vpop.permute.xlu0 %748
        %v752 = vsel %vm236, %v650, %v663
        %v755 = vsel %vm236, %v651, %v665
        %vm756 = vcmask 261120
        %v758 = vsel %vm756, %v752, %v677
        %v760 = vsel %vm756, %v755, %v679
        %vm761 = vcmask 392192
        %v763 = vsel %vm761, %v758, %v691
        %v765 = vsel %vm761, %v760, %v693
        %vm766 = vcmask 523264
        %v768 = vsel %vm766, %v763, %v705
        %v770 = vsel %vm766, %v765, %v707
        %vm771 = vcmask 654336
        %v773 = vsel %vm771, %v768, %v719
        %v775 = vsel %vm771, %v770, %v721
        %vm776 = vcmask 785408
        %v778 = vsel %vm776, %v773, %v733
        %v780 = vsel %vm776, %v775, %v735
        %vm781 = vcmask 916480
        %v783 = vsel %vm781, %v778, %v747
        %v786 = vsel %vm781, %v780, %v749
        %v788 = vld [vmem:[%s2] sm:$0xf]
        %v789 = vld [vmem:[%s2 + $0x4] sm:$0xf]
        %v790 = vld [vmem:[%s2 + $0x8] sm:$0xf]
        %v791 = vld [vmem:[%s2 + $0xc] sm:$0xf]
        %v792 = vld [vmem:[%s3] sm:$0xff]
        %v793 = vld [vmem:[%s3 + $0x8] sm:$0xff]
        %v794 = vld [vmem:[%s3 + $0x10] sm:$0xff]
        %v795 = vld [vmem:[%s3 + $0x18] sm:$0xff]
        %797 = vset.pattern.permute.xlu0 0
        %798 = vperm.xlu0 %797, %v792
        %v799 = vpop.permute.xlu0 %798
        %802 = vset.pattern.permute.xlu0 0
        %803 = vperm.xlu0 %802, %v793
        %v804 = vpop.permute.xlu0 %803
        %807 = vset.pattern.permute.xlu0 0
        %808 = vperm.xlu0 %807, %v794
        %v809 = vpop.permute.xlu0 %808
        %812 = vset.pattern.permute.xlu0 0
        %813 = vperm.xlu0 %812, %v795
        %v814 = vpop.permute.xlu0 %813
        %v820 = vunpack.c.l.b16 %v788
        %v821 = vunpack.c.l.b16 %v789
        %v822 = vunpack.c.l.b16 %v790
        %v823 = vunpack.c.l.b16 %v791
        %v824 = vpack.c.b16 %v821, %v820
        %v825 = vpack.c.b16 %v823, %v822
        %v827 = vsel %vm756, %v824, 0
        %v830 = vsel %vm756, %v825, 0
        %832 = vmatpush.bf16.msra.mxu0 0
        %833 = vmatpush.bf16.msra.mxu0 0
        %834 = vmatpush.bf16.msra.mxu0 0
        %835 = vmatpush.bf16.msra.mxu0 0
        %836 = vmatpush.bf16.msra.mxu0 0
        %837 = vmatpush.bf16.msra.mxu0 0
        %838 = vmatpush.bf16.msra.mxu0 %v786
        %839 = vmatpush.bf16.msra.mxu0 %v783
        %840 = vmatmul.bf16.gmra.mxu0 %v827
        %v841 = vpop.f32.mrf.mxu0
        %v842 = vadd.f32 %v799, %v841
        %v843 = vpop.f32.mrf.mxu0
        %v844 = vadd.f32 %v804, %v843
        %845 = vmatmul.bf16.gmra.mxu0 %v830
        %v846 = vpop.f32.mrf.mxu0
        %v847 = vadd.f32 %v809, %v846
        %v848 = vpop.f32.mrf.mxu0
        %v849 = vadd.f32 %v814, %v848
        %850 = vdwg.mxu0
        %vm851 = vcmp.gt.f32.partialorder %v842, 0.0
        %vm852 = vcmp.gt.f32.partialorder %v844, 0.0
        %vm853 = vcmp.gt.f32.partialorder %v847, 0.0
        %vm854 = vcmp.gt.f32.partialorder %v849, 0.0
        %v855 = vmul.f32 %v842, 0.2
        %v856 = vmul.f32 %v844, 0.2
        %v857 = vmul.f32 %v847, 0.2
        %v858 = vmul.f32 %v849, 0.2
        %v859 = vsel %vm851, %v842, %v855
        %v860 = vsel %vm852, %v844, %v856
        %v861 = vsel %vm853, %v847, %v857
        %v862 = vsel %vm854, %v849, %v858
        %863 = vst [vmem:[%s211] sm:$0xff] %v859
        %864 = vst [vmem:[%s211 + $0x8] sm:$0xff] %v860
        %865 = vst [vmem:[%s211 + $0x10] sm:$0xff] %v861
        %866 = vst [vmem:[%s211 + $0x18] sm:$0xff] %v862
        %s867 = sand.u32 %s120, 1
        %s868 = scalar_lea.sflag [#allocation3], %s867
        %s869 = sand.u32 %s120, 1
        %s870 = smul.addr %s869, 32
        %s871 = scalar_lea.vmem [#allocation2], %s870
        // Predicated region
        $region37: #{tpu_custom_call.1} parent=35 // pred_check
          %p872 = pneg %p130
        $region38: #{tpu_custom_call.1} parent=35 // pred_check_branch
          %874 = sbr.rel (%p872) target = $region40
        $region39: #{tpu_custom_call.1} parent=35 // pred_region
          %876 = vsyncadd %s868, 0
          %s877 = smul.addr %s18, 4
          %s878 = smul.addr %s877, 8
          %s879 = scalar_lea.hbm %s4, %s878
          %s880 = sshll.u32 %s871, 4
          %s881 = int_to_ptr.vmem [resolvable:$true] %s880
          %s882 = sshll.u32 %s879, 4
          %s883 = int_to_ptr.hbm [resolvable:$true] %s882
          %888 = dma.vmem_to_hbm [thread:$0]  %s881, 512, %s883, %s868, 128, 128, 8
        $region40: #{tpu_custom_call.1} parent=35 // pred_fallthru
          _
      $region36: #{tpu_custom_call.1} parent=5 // pred_fallthru
        _
      %p889 = scmp.le.s32.totalorder 2, %s13
      // Predicated region
      $region41: #{tpu_custom_call.1} parent=5 // pred_check
        %p890 = pneg %p889
      $region42: #{tpu_custom_call.1} parent=5 // pred_check_branch
        %892 = sbr.rel (%p890) target = $region44
      $region43: #{tpu_custom_call.1} parent=5 // pred_region
        %s893 = ssub.s32 %s13, 2
        // Predicated region
        $region45: #{tpu_custom_call.1} parent=43 // pred_check
          %p894 = pneg %p136
        $region46: #{tpu_custom_call.1} parent=43 // pred_check_branch
          %896 = sbr.rel (%p894) target = $region48
        $region47: #{tpu_custom_call.1} parent=43 // pred_region
          %s897 = sand.u32 %s121, 1
          %s898 = scalar_lea.sflag [#allocation3], %s897
          %s899 = sand.u32 %s121, 1
          %s900 = smul.addr %s899, 32
          %s901 = scalar_lea.vmem [#allocation2], %s900
          %903 = dma.done %s898, 512
        $region48: #{tpu_custom_call.1} parent=43 // pred_fallthru
          _
      $region44: #{tpu_custom_call.1} parent=5 // pred_fallthru
        _
    $region6: #{tpu_custom_call.1} parent=1 // loop_footer
      %s17 = sadd.s32 1, %s13
    $region7: #{tpu_custom_call.1} parent=1 // loop_footer_branch
      %12 = sbr.rel target = $region3
    $region8: #{tpu_custom_call.1} parent=1 // loop_exit
      _
    %904 = vsyncpa [#allocation3], 1
    %s905 = scalar_lea.sflag [#allocation3], 1
    %906 = vsyncpa %s905, 1

</llo_original>
